<compile_context>
chip_gen: v6e
topology: v6e:2x2x1
jax: 0.10.0
libtpu: 0.0.40
codegen_flags: <defaults>
</compile_context>

<pallas_src>
import jax
import jax.numpy as jnp
from jax import lax
from jax.experimental import pallas as pl
from jax.experimental.pallas import tpu as pltpu


def linear_kernel(x_ref, w_ref, b_ref, o_ref):
    # x_ref: (B, IN)    f32
    # w_ref: (IN, OUT)  f32  (pre-transposed once at param-creation time)
    # b_ref: (1, OUT)   f32
    # o_ref: (B, OUT)   f32
    x = x_ref[...]
    w = w_ref[...]
    b = b_ref[...]
    # Canonical contraction: x's last dim with w's first dim -> (B, OUT).
    # Single MXU matmul, no relayout of the RHS needed.
    acc = lax.dot_general(
        x, w,
        dimension_numbers=(((1,), (0,)), ((), ())),
        preferred_element_type=jnp.float32,
    )
    o_ref[...] = (acc + b).astype(o_ref.dtype)


def linear_forward(x, weight_io, bias2d):
    """x: (B, IN) f32, weight_io: (IN, OUT) f32 (already transposed), bias2d: (1, OUT) f32."""
    B, IN = x.shape
    OUT = weight_io.shape[1]

    cost = pl.CostEstimate(
        flops=2 * B * IN * OUT,
        transcendentals=0,
        bytes_accessed=4 * (B * IN + IN * OUT + OUT + B * OUT),
    )

    return pl.pallas_call(
        linear_kernel,
        out_shape=jax.ShapeDtypeStruct((B, OUT), x.dtype),
        in_specs=[
            pl.BlockSpec(memory_space=pltpu.MemorySpace.VMEM),  # x   (whole array)
            pl.BlockSpec(memory_space=pltpu.MemorySpace.VMEM),  # W^T (whole array)
            pl.BlockSpec(memory_space=pltpu.MemorySpace.VMEM),  # b   (whole array)
        ],
        out_specs=pl.BlockSpec(memory_space=pltpu.MemorySpace.VMEM),
        cost_estimate=cost,
    )(x, weight_io, bias2d)


if __name__ == "__main__":
    key = jax.random.PRNGKey(0)
    k_x, k_w, k_b = jax.random.split(key, 3)

    B, IN, OUT = 8, 10, 2

    # Deterministic parameter init (mimics PyTorch's uniform(-1/sqrt(IN), 1/sqrt(IN))).
    bound = 1.0 / jnp.sqrt(jnp.float32(IN))
    # PyTorch nn.Linear layout (OUT, IN) ...
    weight_pt = jax.random.uniform(k_w, (OUT, IN), jnp.float32, -bound, bound)
    # ... pre-transposed ONCE here at parameter-creation time (not on the call path).
    weight_io = jnp.asarray(weight_pt.T)            # (IN, OUT)
    bias2d = jax.random.uniform(k_b, (1, OUT), jnp.float32, -bound, bound)

    x = jax.random.normal(k_x, (B, IN), jnp.float32)

    y = linear_forward(x, weight_io, bias2d)
    y = jax.block_until_ready(y)

    # Correctness check vs plain JAX reference with PyTorch semantics: x @ W^T + b.
    y_ref = x @ weight_pt.T + bias2d
    assert y.shape == (B, OUT)
    assert jnp.allclose(y, y_ref, atol=1e-5, rtol=1e-5)

    print("KERNEL_OK")
</pallas_src>

<mosaic_0001>
module attributes {stable_mosaic.version = 11 : i64} {
  func.func @linear_kernel(%arg0: memref<8x10xf32, #tpu.memory_space<vmem>>, %arg1: memref<10x2xf32, #tpu.memory_space<vmem>>, %arg2: memref<1x2xf32, #tpu.memory_space<vmem>>, %arg3: memref<8x2xf32, #tpu.memory_space<vmem>>) attributes {dimension_semantics = [], scalar_prefetch = 0 : i64, scratch_operands = 0 : i64, tpu.core_type = #tpu.core_type<tc>} {
    %c0 = arith.constant 0 : index
    %c0_0 = arith.constant 0 : index
    %0 = vector.load %arg0[%c0, %c0_0] : memref<8x10xf32, #tpu.memory_space<vmem>>, vector<8x10xf32>
    %c0_1 = arith.constant 0 : index
    %c0_2 = arith.constant 0 : index
    %1 = vector.load %arg1[%c0_1, %c0_2] : memref<10x2xf32, #tpu.memory_space<vmem>>, vector<10x2xf32>
    %c0_3 = arith.constant 0 : index
    %c0_4 = arith.constant 0 : index
    %2 = vector.load %arg2[%c0_3, %c0_4] : memref<1x2xf32, #tpu.memory_space<vmem>>, vector<1x2xf32>
    %cst = arith.constant dense<0.000000e+00> : vector<8x2xf32>
    %3 = tpu.matmul %0, %1, %cst {dimension_numbers = #tpu.dot_dimension_numbers<[1], [0], [0], [1], [0, 0, 1, 1], [], []>} : vector<8x10xf32>, vector<10x2xf32>, vector<8x2xf32> -> vector<8x2xf32>
    %4 = vector.broadcast %2 : vector<1x2xf32> to vector<8x2xf32>
    %5 = arith.addf %3, %4 : vector<8x2xf32>
    %c0_5 = arith.constant 0 : index
    %c0_6 = arith.constant 0 : index
    %6 = vector.load %arg3[%c0_5, %c0_6] : memref<8x2xf32, #tpu.memory_space<vmem>>, vector<8x2xf32>
    tpu.vector_store %arg3[%c0_5, %c0_6], %5 {strides = array<i32>} : memref<8x2xf32, #tpu.memory_space<vmem>>, vector<8x2xf32>,
    return
  }
}

</mosaic_0001>

<llo_original>
// kernel: tpu_custom_call.1
$region0: #{tpu_custom_call.1}
  #allocation0 [shape = 'u32[]', space=smem, size = 0x4, offset = 0x4, fixed_abs, tag = 'smem constant byte address 0x4 - core index']
  #allocation1 [shape = 'u32[144,128]{1,0:T(1,128)}', space=vmem, size = 0x12000, scoped, tag = 'internal scratch']
  %s0 = inlined_call_operand.vmem [shape: f32[8,10], index: 0, kind: input, shape index: {}]
  %s1 = inlined_call_operand.vmem [shape: f32[10,2], index: 1, kind: input, shape index: {}]
  %s2 = inlined_call_operand.vmem [shape: f32[1,2], index: 2, kind: input, shape index: {}]
  %s3 = inlined_call_operand.vmem [shape: f32[8,2], index: 3, kind: output, shape index: {}]
  %s4 = sld [smem:[#allocation0]]
  $region22: #{tpu_custom_call.1} parent=0
    _
  %s6 = ssub.s32 1, %s4
  %s7 = scalar_select 0, %s6, %s4
  // Predicated region
  $region2: #{tpu_custom_call.1} parent=0 // pred_check
    _
  $region3: #{tpu_custom_call.1} parent=0 // pred_check_branch
    %9 = sbr.rel (0) target = $region5
  $region4: #{tpu_custom_call.1} parent=0 // pred_region
    _
  $region5: #{tpu_custom_call.1} parent=0 // pred_fallthru
    _
  // Predicated region
  $region6: #{tpu_custom_call.1} parent=0 // pred_check
    _
  $region7: #{tpu_custom_call.1} parent=0 // pred_check_branch
    %11 = sbr.rel (0) target = $region9
  $region8: #{tpu_custom_call.1} parent=0 // pred_region
    _
  $region9: #{tpu_custom_call.1} parent=0 // pred_fallthru
    _
  // Predicated region
  $region10: #{tpu_custom_call.1} parent=0 // pred_check
    _
  $region11: #{tpu_custom_call.1} parent=0 // pred_check_branch
    %13 = sbr.rel (0) target = $region13
  $region12: #{tpu_custom_call.1} parent=0 // pred_region
    _
  $region13: #{tpu_custom_call.1} parent=0 // pred_fallthru
    _
  %v14 = vld [vmem:[%s0] sm:$0xff]
  %v15 = vld [vmem:[%s1] sm:$0xff]
  %v16 = vld [vmem:[%s1 + $0x8] sm:$0x3]
  %v17 = vld [vmem:[%s2] sm:$0x1]
  %v19 = vlaneseq
  %v20 = vshrl.u32 %v19, 7
  %v21 = vsub.s32 0, %v20
  %v22 = vrot.slane %v17, %v21
  %vm24 = vcmask 80896
  %v26 = vsel %vm24, %v14, 0
  %vm28 = vcmask 1041408
  %v30 = vsel %vm28, %v16, 0
  %32 = vmatprep.subr.mxu0 0.0
  %33 = vmatpush1.msra.mxu0 0.0
  %34 = vmatprep.subr.mxu0 0.0
  %35 = vmatpush1.msra.mxu0 0.0
  %36 = vmatprep.subr.mxu0 0.0
  %37 = vmatpush1.msra.mxu0 0.0
  %38 = vmatprep.subr.mxu0 0.0
  %39 = vmatpush1.msra.mxu0 0.0
  %40 = vmatprep.subr.mxu0 0.0
  %41 = vmatpush1.msra.mxu0 0.0
  %42 = vmatprep.subr.mxu0 0.0
  %43 = vmatpush1.msra.mxu0 0.0
  %44 = vmatprep.subr.mxu0 0.0
  %45 = vmatpush1.msra.mxu0 0.0
  %46 = vmatprep.subr.mxu0 0.0
  %47 = vmatpush1.msra.mxu0 0.0
  %48 = vmatprep.subr.mxu0 0.0
  %49 = vmatpush1.msra.mxu0 0.0
  %50 = vmatprep.subr.mxu0 0.0
  %51 = vmatpush1.msra.mxu0 0.0
  %52 = vmatprep.subr.mxu0 0.0
  %53 = vmatpush1.msra.mxu0 0.0
  %54 = vmatprep.subr.mxu0 0.0
  %55 = vmatpush1.msra.mxu0 0.0
  %56 = vmatprep.subr.mxu0 0.0
  %57 = vmatpush1.msra.mxu0 0.0
  %58 = vmatprep.subr.mxu0 0.0
  %59 = vmatpush1.msra.mxu0 0.0
  %60 = vmatprep.subr.mxu0 0.0
  %61 = vmatpush1.msra.mxu0 %v30
  %62 = vmatprep.subr.mxu0 0.0
  %63 = vmatpush1.msra.mxu0 %v15
  %64 = vmatprep.subr.mxu0 0.0
  %65 = vmatpush2.msra.mxu0 0.0
  %66 = vmatprep.subr.mxu0 0.0
  %67 = vmatpush2.msra.mxu0 0.0
  %68 = vmatprep.subr.mxu0 0.0
  %69 = vmatpush2.msra.mxu0 0.0
  %70 = vmatprep.subr.mxu0 0.0
  %71 = vmatpush2.msra.mxu0 0.0
  %72 = vmatprep.subr.mxu0 0.0
  %73 = vmatpush2.msra.mxu0 0.0
  %74 = vmatprep.subr.mxu0 0.0
  %75 = vmatpush2.msra.mxu0 0.0
  %76 = vmatprep.subr.mxu0 0.0
  %77 = vmatpush2.msra.mxu0 0.0
  %78 = vmatprep.subr.mxu0 0.0
  %79 = vmatpush2.msra.mxu0 0.0
  %80 = vmatprep.subr.mxu0 0.0
  %81 = vmatpush2.msra.mxu0 0.0
  %82 = vmatprep.subr.mxu0 0.0
  %83 = vmatpush2.msra.mxu0 0.0
  %84 = vmatprep.subr.mxu0 0.0
  %85 = vmatpush2.msra.mxu0 0.0
  %86 = vmatprep.subr.mxu0 0.0
  %87 = vmatpush2.msra.mxu0 0.0
  %88 = vmatprep.subr.mxu0 0.0
  %89 = vmatpush2.msra.mxu0 0.0
  %90 = vmatprep.subr.mxu0 0.0
  %91 = vmatpush2.msra.mxu0 0.0
  %92 = vmatprep.subr.mxu0 0.0
  %93 = vmatpush2.msra.mxu0 0.0
  %94 = vmatprep.subr.mxu0 0.0
  %95 = vmatpush2.msra.mxu0 0.0
  %96 = vmatprep.mubr.f32.mxu0 0.0
  %97 = vmatmul.mubr.f32.gmra.mxu0 %v26
  %v98 = vpop.f32.mrf.mxu0
  %v99 = vadd.f32 %v22, %v98
  %v100 = vpop.f32.mrf.mxu0
  %101 = vdwg.mxu0
  %vm102 = vcmask 15360
  %103 = vst.msk [vmem:[%s3] sm:$0xff] %vm102, %v99
  // Predicated region
  $region14: #{tpu_custom_call.1} parent=0 // pred_check
    _
  $region15: #{tpu_custom_call.1} parent=0 // pred_check_branch
    %105 = sbr.rel (0) target = $region17
  $region16: #{tpu_custom_call.1} parent=0 // pred_region
    _
  $region17: #{tpu_custom_call.1} parent=0 // pred_fallthru
    _
  // Predicated region
  $region18: #{tpu_custom_call.1} parent=0 // pred_check
    _
  $region19: #{tpu_custom_call.1} parent=0 // pred_check_branch
    %107 = sbr.rel (0) target = $region21
  $region20: #{tpu_custom_call.1} parent=0 // pred_region
    _
  $region21: #{tpu_custom_call.1} parent=0 // pred_fallthru
    _

</llo_original>
